<compile_context>
chip_gen: v6e
topology: v6e:2x2x1
jax: 0.10.0
libtpu: 0.0.40
codegen_flags: <defaults>
</compile_context>

<pallas_src>
import jax
import jax.numpy as jnp
from jax import lax
from jax.experimental import pallas as pl
from jax.experimental.pallas import tpu as pltpu

BN_EPS = 1e-5


def _cdiv(a, b):
    return -(-a // b)


def _round_up(n, m):
    return _cdiv(n, m) * m


def _hw_tiling_config():
    """Per-generation (tile_b cap, vmem_limit_bytes, min grid steps).

    VMEM per step ~= 1.5 KB * tile_b (lane-padded x double-buffers dominate),
    so the caps below stay well inside each generation's physical VMEM while
    moving >= ~0.5-2 MiB of input per grid step.
    """
    kind = ""
    try:
        kind = jax.devices()[0].device_kind.lower()
    except Exception:
        pass
    if "v2" in kind or "v3" in kind:
        # Older chips: small VMEM, keep the default scoped limit.
        return 4096, None, 2
    if "v5 lite" in kind or "v5e" in kind or "v5lite" in kind:
        # v5e: ~820 GB/s HBM, 16 MiB default scoped VMEM -> modest tiles suffice.
        return 8192, 64 * 1024 * 1024, 2
    if "v4" in kind or "v5" in kind or "v6" in kind:
        # 128 MiB physical VMEM (v4/v5p/v6e), 1.3-1.6 TB/s HBM: go big.
        return 32768, 96 * 1024 * 1024, 2
    # v7x / unknown: 64 MiB physical VMEM, 2 TensorCores -> keep >= 4 steps.
    return 16384, 48 * 1024 * 1024, 4


def _choose_tiling(B, tile_cap, min_steps):
    """Pick (tile_b, B_pad): tile_b multiple of 128, B_pad multiple of tile_b,
    padding waste bounded (~1/min_steps worst case, ~1% typical)."""
    b = max(int(B), 1)
    n_steps = max(min_steps, _cdiv(b, tile_cap))
    tile_b = _round_up(_cdiv(b, n_steps), 128)
    tile_b = min(tile_b, max(tile_cap, 128), _round_up(b, 128))
    tile_b = max(tile_b, 128)
    B_pad = _round_up(b, tile_b)
    return tile_b, B_pad


def _make_fracdeepsurv_kernel(num_blocks):
    """Fused kernel: num_blocks x [Linear (BN pre-folded) -> ReLU], all f32."""

    def kernel(x_ref, *refs):
        # refs = [W0, b0, W1, b1, ..., out_ref]
        #   W_i: (d_out, d_in) f32, b_i: (d_out, 1) f32 (lane-broadcast bias).
        out_ref = refs[-1]
        p = refs[:-1]

        # Layer 0: x block is (tile_b, d_in) in natural layout; contract over
        # d_in against W0 (d_out, d_in) -> lane-dense (d_out, tile_b) result.
        h = lax.dot_general(
            p[0][...], x_ref[...],
            dimension_numbers=(((1,), (1,)), ((), ())),
            preferred_element_type=jnp.float32,
        )
        h = jnp.maximum(h + p[1][...], 0.0)

        # Remaining layers: (d_out, d_in) @ (d_in, tile_b), f32 throughout.
        for i in range(1, num_blocks):
            w = p[2 * i][...]
            b = p[2 * i + 1][...]
            h = jnp.dot(w, h, preferred_element_type=jnp.float32)
            h = jnp.maximum(h + b, 0.0)

        out_ref[...] = h.astype(out_ref.dtype)

    return kernel


def fold_bn_into_linear(params, dims):
    """Fold eval-mode BatchNorm1d into the preceding Linear (all f32)."""
    folded = []
    for i in range(len(dims) - 1):
        w, b, g, bt, mu, var = params[6 * i: 6 * i + 6]
        s = g * lax.rsqrt(var + BN_EPS)              # (1, d_out)
        w_f = w * s                                  # (d_in, d_out)
        b_f = (b - mu) * s + bt                      # (1, d_out)
        folded.append((w_f, b_f))
    return folded


def frac_deep_surv_forward(x, params, *, dims, tile_b=None, vmem_limit_bytes=None):
    """Fused FracDeepSurv forward pass (eval mode).

    x:      (B, dims[0]) float32, natural layout (consumed as-is).
    params: flat list [W0, b0, gamma0, beta0, mean0, var0, W1, ...]
            W_i: (dims[i], dims[i+1]); all others (1, dims[i+1]).
    Returns (B, dims[-1]) float32.
    """
    B = x.shape[0]
    num_blocks = len(dims) - 1
    out_dim = dims[-1]

    # Host-side prep: fold BN into the Linear; transpose the tiny weights once
    # (a few KB total — negligible next to the x read).
    kernel_params = []
    for w_f, b_f in fold_bn_into_linear(params, dims):
        kernel_params.append(jnp.asarray(w_f.T, jnp.float32))    # (d_out, d_in)
        kernel_params.append(jnp.asarray(b_f.T, jnp.float32))    # (d_out, 1)

    tile_cap, hw_vmem_limit, min_steps = _hw_tiling_config()
    if vmem_limit_bytes is None:
        vmem_limit_bytes = hw_vmem_limit
    if tile_b is None:
        tile_b, B_pad = _choose_tiling(B, tile_cap, min_steps)
    else:
        tile_b = max(128, _round_up(int(tile_b), 128))
        B_pad = _round_up(max(B, 1), tile_b)

    # Pad only the batch axis up to B_pad (bounded waste); no transpose/cast.
    x32 = x.astype(jnp.float32)
    if B_pad != B:
        x32 = jnp.pad(x32, ((0, B_pad - B), (0, 0)))

    kernel = _make_fracdeepsurv_kernel(num_blocks)

    in_specs = [pl.BlockSpec((tile_b, dims[0]), lambda i: (i, 0))]
    for p in kernel_params:
        # Tiny resident params: constant block index -> loaded once, re-used
        # every batch tile (no per-step re-DMA).
        in_specs.append(pl.BlockSpec(p.shape, lambda i: (0, 0)))
    out_specs = pl.BlockSpec((out_dim, tile_b), lambda i: (0, i))

    compiler_params = pltpu.CompilerParams(
        dimension_semantics=("parallel",),
        vmem_limit_bytes=vmem_limit_bytes,
    )

    out_t = pl.pallas_call(
        kernel,
        out_shape=jax.ShapeDtypeStruct((out_dim, B_pad), jnp.float32),
        grid=(B_pad // tile_b,),
        in_specs=in_specs,
        out_specs=out_specs,
        compiler_params=compiler_params,
    )(x32, *kernel_params)

    # Output is tiny ((out_dim, B_pad)); flip back to (B, out_dim) on host.
    return out_t.T[:B, :]


def init_params(key, dims):
    """Deterministic synthetic parameter init (shapes match the PyTorch module)."""
    params = []
    for i in range(len(dims) - 1):
        d_in, d_out = dims[i], dims[i + 1]
        key, kw, kb, kg, kbt, km, kv = jax.random.split(key, 7)
        w = jax.random.normal(kw, (d_in, d_out), jnp.float32) / jnp.sqrt(
            jnp.float32(d_in))
        b = 0.1 * jax.random.normal(kb, (1, d_out), jnp.float32)
        gamma = 1.0 + 0.1 * jax.random.normal(kg, (1, d_out), jnp.float32)
        beta = 0.1 * jax.random.normal(kbt, (1, d_out), jnp.float32)
        run_mean = 0.1 * jax.random.normal(km, (1, d_out), jnp.float32)
        run_var = 1.0 + 0.1 * jax.random.uniform(kv, (1, d_out), jnp.float32)
        params += [w, b, gamma, beta, run_mean, run_var]
    return params


def reference_forward_unfused(x, params, dims):
    """Pure-JAX f32 reference: Linear -> BN(running stats) -> ReLU per block."""
    h = x
    for i in range(len(dims) - 1):
        w, b, g, bt, mu, var = params[6 * i: 6 * i + 6]
        h = h @ w + b
        h = (h - mu) * lax.rsqrt(var + BN_EPS) * g + bt
        h = jnp.maximum(h, 0.0)
    return h


def reference_forward_folded_f32(x, params, dims):
    """f32 reference with BN folded into the Linear (validates the folding)."""
    h = x
    for w_f, b_f in fold_bn_into_linear(params, dims):
        h = jnp.maximum(h @ w_f + b_f, 0.0)
    return h


if __name__ == "__main__":
    # config = {'activation': 'ReLU', 'dropout': 0.1, 'dims': [16, 32, 32, 1],
    #           'batch_norm': True}
    dims = [16, 32, 32, 1]
    batch = 16

    key = jax.random.PRNGKey(0)
    key, kx = jax.random.split(key)
    x = jax.random.normal(kx, (batch, dims[0]), jnp.float32)
    params = init_params(key, dims)

    out = frac_deep_surv_forward(x, params, dims=dims)
    out = jax.block_until_ready(out)
    assert out.shape == (batch, dims[-1])

    # 1) BN folding is exact (pure f32 host-side math).
    ref_unfused = reference_forward_unfused(x, params, dims)
    ref_folded = reference_forward_folded_f32(x, params, dims)
    assert jnp.allclose(ref_folded, ref_unfused, atol=1e-5, rtol=1e-5), \
        "BN folding mismatch"

    # 2) Kernel (all-f32) matches the f32 reference. Tolerance allows for the
    #    MXU's default f32-matmul pass precision vs the XLA reference matmul.
    assert jnp.allclose(out, ref_unfused, atol=1e-2, rtol=1e-2), \
        "kernel mismatch vs f32 reference"

    print("KERNEL_OK")
</pallas_src>

<mosaic_0001>
module attributes {stable_mosaic.version = 11 : i64} {
  func.func @kernel(%arg0: i32, %arg1: memref<128x16xf32, #tpu.memory_space<vmem>>, %arg2: memref<32x16xf32, #tpu.memory_space<vmem>>, %arg3: memref<32x1xf32, #tpu.memory_space<vmem>>, %arg4: memref<32x32xf32, #tpu.memory_space<vmem>>, %arg5: memref<32x1xf32, #tpu.memory_space<vmem>>, %arg6: memref<1x32xf32, #tpu.memory_space<vmem>>, %arg7: memref<1x1xf32, #tpu.memory_space<vmem>>, %arg8: memref<1x128xf32, #tpu.memory_space<vmem>>) attributes {dimension_semantics = [#tpu.dimension_semantics<parallel>], iteration_bounds = array<i64: 1>, scalar_prefetch = 0 : i64, scratch_operands = 0 : i64, tpu.core_type = #tpu.core_type<tc>, window_params = [{transform_indices = @transform_0, window_bounds = array<i64: 128, 16>}, {pipeline_mode = #tpu.pipeline_mode<synchronous>, transform_indices = @transform_1, window_bounds = array<i64: 32, 16>}, {pipeline_mode = #tpu.pipeline_mode<synchronous>, transform_indices = @transform_2, window_bounds = array<i64: 32, 1>}, {pipeline_mode = #tpu.pipeline_mode<synchronous>, transform_indices = @transform_3, window_bounds = array<i64: 32, 32>}, {pipeline_mode = #tpu.pipeline_mode<synchronous>, transform_indices = @transform_4, window_bounds = array<i64: 32, 1>}, {pipeline_mode = #tpu.pipeline_mode<synchronous>, transform_indices = @transform_5, window_bounds = array<i64: 1, 32>}, {pipeline_mode = #tpu.pipeline_mode<synchronous>, transform_indices = @transform_6, window_bounds = array<i64: 1, 1>}, {transform_indices = @transform_7, window_bounds = array<i64: 1, 128>}]} {
    %c0 = arith.constant 0 : index
    %c0_0 = arith.constant 0 : index
    %0 = vector.load %arg2[%c0, %c0_0] : memref<32x16xf32, #tpu.memory_space<vmem>>, vector<32x16xf32>
    %c0_1 = arith.constant 0 : index
    %c0_2 = arith.constant 0 : index
    %1 = vector.load %arg1[%c0_1, %c0_2] : memref<128x16xf32, #tpu.memory_space<vmem>>, vector<128x16xf32>
    %cst = arith.constant dense<0.000000e+00> : vector<32x128xf32>
    %2 = tpu.matmul %0, %1, %cst {dimension_numbers = #tpu.dot_dimension_numbers<[1], [1], [0], [0], [0, 0, 1, 0], [], []>} : vector<32x16xf32>, vector<128x16xf32>, vector<32x128xf32> -> vector<32x128xf32>
    %c0_3 = arith.constant 0 : index
    %c0_4 = arith.constant 0 : index
    %3 = vector.load %arg3[%c0_3, %c0_4] : memref<32x1xf32, #tpu.memory_space<vmem>>, vector<32x1xf32>
    %4 = vector.broadcast %3 : vector<32x1xf32> to vector<32x128xf32>
    %5 = arith.addf %2, %4 : vector<32x128xf32>
    %cst_5 = arith.constant 0.000000e+00 : f32
    %6 = vector.broadcast %cst_5 : f32 to vector<32x128xf32>
    %7 = arith.maximumf %5, %6 : vector<32x128xf32>
    %c0_6 = arith.constant 0 : index
    %c0_7 = arith.constant 0 : index
    %8 = vector.load %arg4[%c0_6, %c0_7] : memref<32x32xf32, #tpu.memory_space<vmem>>, vector<32x32xf32>
    %c0_8 = arith.constant 0 : index
    %c0_9 = arith.constant 0 : index
    %9 = vector.load %arg5[%c0_8, %c0_9] : memref<32x1xf32, #tpu.memory_space<vmem>>, vector<32x1xf32>
    %cst_10 = arith.constant dense<0.000000e+00> : vector<32x128xf32>
    %10 = tpu.matmul %8, %7, %cst_10 {dimension_numbers = #tpu.dot_dimension_numbers<[1], [0], [0], [1], [0, 0, 1, 1], [], []>} : vector<32x32xf32>, vector<32x128xf32>, vector<32x128xf32> -> vector<32x128xf32>
    %11 = vector.broadcast %9 : vector<32x1xf32> to vector<32x128xf32>
    %12 = arith.addf %10, %11 : vector<32x128xf32>
    %cst_11 = arith.constant 0.000000e+00 : f32
    %13 = vector.broadcast %cst_11 : f32 to vector<32x128xf32>
    %14 = arith.maximumf %12, %13 : vector<32x128xf32>
    %c0_12 = arith.constant 0 : index
    %c0_13 = arith.constant 0 : index
    %15 = vector.load %arg6[%c0_12, %c0_13] : memref<1x32xf32, #tpu.memory_space<vmem>>, vector<1x32xf32>
    %c0_14 = arith.constant 0 : index
    %c0_15 = arith.constant 0 : index
    %16 = vector.load %arg7[%c0_14, %c0_15] : memref<1x1xf32, #tpu.memory_space<vmem>>, vector<1x1xf32>
    %cst_16 = arith.constant dense<0.000000e+00> : vector<1x128xf32>
    %17 = tpu.matmul %15, %14, %cst_16 {dimension_numbers = #tpu.dot_dimension_numbers<[1], [0], [0], [1], [0, 0, 1, 1], [], []>} : vector<1x32xf32>, vector<32x128xf32>, vector<1x128xf32> -> vector<1x128xf32>
    %18 = vector.broadcast %16 : vector<1x1xf32> to vector<1x128xf32>
    %19 = arith.addf %17, %18 : vector<1x128xf32>
    %cst_17 = arith.constant 0.000000e+00 : f32
    %20 = vector.broadcast %cst_17 : f32 to vector<1x128xf32>
    %21 = arith.maximumf %19, %20 : vector<1x128xf32>
    %c0_18 = arith.constant 0 : index
    %c0_19 = arith.constant 0 : index
    %22 = vector.load %arg8[%c0_18, %c0_19] : memref<1x128xf32, #tpu.memory_space<vmem>>, vector<1x128xf32>
    tpu.vector_store %arg8[%c0_18, %c0_19], %21 {strides = array<i32>} : memref<1x128xf32, #tpu.memory_space<vmem>>, vector<1x128xf32>,
    return
  }
  func.func @transform_0(%arg0: i32) -> (i32, i32) {
    %c0_i32 = arith.constant 0 : i32
    %c0_i32_0 = arith.constant 0 : i32
    return %arg0, %c0_i32 : i32, i32
  }
  func.func @transform_1(%arg0: i32) -> (i32, i32) {
    %c0_i32 = arith.constant 0 : i32
    %c0_i32_0 = arith.constant 0 : i32
    %c0_i32_1 = arith.constant 0 : i32
    return %c0_i32, %c0_i32_0 : i32, i32
  }
  func.func @transform_2(%arg0: i32) -> (i32, i32) {
    %c0_i32 = arith.constant 0 : i32
    %c0_i32_0 = arith.constant 0 : i32
    %c0_i32_1 = arith.constant 0 : i32
    return %c0_i32, %c0_i32_0 : i32, i32
  }
  func.func @transform_3(%arg0: i32) -> (i32, i32) {
    %c0_i32 = arith.constant 0 : i32
    %c0_i32_0 = arith.constant 0 : i32
    %c0_i32_1 = arith.constant 0 : i32
    return %c0_i32, %c0_i32_0 : i32, i32
  }
  func.func @transform_4(%arg0: i32) -> (i32, i32) {
    %c0_i32 = arith.constant 0 : i32
    %c0_i32_0 = arith.constant 0 : i32
    %c0_i32_1 = arith.constant 0 : i32
    return %c0_i32, %c0_i32_0 : i32, i32
  }
  func.func @transform_5(%arg0: i32) -> (i32, i32) {
    %c0_i32 = arith.constant 0 : i32
    %c0_i32_0 = arith.constant 0 : i32
    %c0_i32_1 = arith.constant 0 : i32
    return %c0_i32, %c0_i32_0 : i32, i32
  }
  func.func @transform_6(%arg0: i32) -> (i32, i32) {
    %c0_i32 = arith.constant 0 : i32
    %c0_i32_0 = arith.constant 0 : i32
    %c0_i32_1 = arith.constant 0 : i32
    return %c0_i32, %c0_i32_0 : i32, i32
  }
  func.func @transform_7(%arg0: i32) -> (i32, i32) {
    %c0_i32 = arith.constant 0 : i32
    %c0_i32_0 = arith.constant 0 : i32
    return %c0_i32, %arg0 : i32, i32
  }
}

</mosaic_0001>

<llo_original>
// kernel: tpu_custom_call.1
$region0: #{tpu_custom_call.1}
  #allocation0 [shape = 'u32[]', space=smem, size = 0x4, offset = 0x4, fixed_abs, tag = 'smem constant byte address 0x4 - core index']
  #allocation1 [shape = 'u32[144,128]{1,0:T(1,128)}', space=vmem, size = 0x12000, scoped, tag = 'internal scratch']
  #allocation2 [shape = 'f32[1,1]{1,0:T(1,128)S(1)}', space=vmem, size = 0x200, scoped, tag = 'scoped memory for tpu_custom_call.1']
  %s0 = inlined_call_operand.vmem [shape: f32[128,16], index: 0, kind: input, shape index: {}]
  %s1 = inlined_call_operand.vmem [shape: f32[32,16], index: 1, kind: input, shape index: {}]
  %s2 = inlined_call_operand.vmem [shape: f32[32,1], index: 2, kind: input, shape index: {}]
  %s3 = inlined_call_operand.vmem [shape: f32[32,32], index: 3, kind: input, shape index: {}]
  %s4 = inlined_call_operand.vmem [shape: f32[32,1], index: 4, kind: input, shape index: {}]
  %s5 = inlined_call_operand.vmem [shape: f32[1,32], index: 5, kind: input, shape index: {}]
  %s6 = inlined_call_operand.<no memory space> [shape: f32[1,1], index: 6, kind: input, shape index: {}]
  %s7 = inlined_call_operand.hbm [shape: f32[1,128], index: 7, kind: output, shape index: {}]
  %s8 = sld [smem:[#allocation0]]
  $region38: #{tpu_custom_call.1} parent=0
    _
  %s10 = ssub.s32 1, %s8
  %s11 = scalar_select 0, %s10, %s8
  %v12 = vstv %s6
  %13 = vst [vmem:[#allocation2] sm:$0x1] %v12
  $region1: #{tpu_custom_call.1} parent=0
    #allocation3 [shape = 'u8[512]{0}', space=vmem, size = 0x400, scoped, tag = 'output window, operand 0, single buffered']
    #allocation4 [shape = 's32[1]{0}', space=sflag, size = 0x4, scoped, tag = 'scoped memory for tpu_custom_call.1']
    %14 = vsyncpa [#allocation4], 0
    // Predicated region
    $region2: #{tpu_custom_call.1} parent=1 // pred_check
      _
    $region3: #{tpu_custom_call.1} parent=1 // pred_check_branch
      %16 = sbr.rel (0) target = $region5
    $region4: #{tpu_custom_call.1} parent=1 // pred_region
      _
    $region5: #{tpu_custom_call.1} parent=1 // pred_fallthru
      _
    // Predicated region
    $region6: #{tpu_custom_call.1} parent=1 // pred_check
      _
    $region7: #{tpu_custom_call.1} parent=1 // pred_check_branch
      %18 = sbr.rel (0) target = $region9
    $region8: #{tpu_custom_call.1} parent=1 // pred_region
      _
    $region9: #{tpu_custom_call.1} parent=1 // pred_fallthru
      _
    // Predicated region
    $region10: #{tpu_custom_call.1} parent=1 // pred_check
      _
    $region11: #{tpu_custom_call.1} parent=1 // pred_check_branch
      %20 = sbr.rel (0) target = $region13
    $region12: #{tpu_custom_call.1} parent=1 // pred_region
      _
    $region13: #{tpu_custom_call.1} parent=1 // pred_fallthru
      _
    // Predicated region
    $region14: #{tpu_custom_call.1} parent=1 // pred_check
      _
    $region15: #{tpu_custom_call.1} parent=1 // pred_check_branch
      %22 = sbr.rel (0) target = $region17
    $region16: #{tpu_custom_call.1} parent=1 // pred_region
      _
    $region17: #{tpu_custom_call.1} parent=1 // pred_fallthru
      _
    // Predicated region
    $region18: #{tpu_custom_call.1} parent=1 // pred_check
      _
    $region19: #{tpu_custom_call.1} parent=1 // pred_check_branch
      %24 = sbr.rel (0) target = $region21
    $region20: #{tpu_custom_call.1} parent=1 // pred_region
      _
    $region21: #{tpu_custom_call.1} parent=1 // pred_fallthru
      _
    // Predicated region
    $region22: #{tpu_custom_call.1} parent=1 // pred_check
      _
    $region23: #{tpu_custom_call.1} parent=1 // pred_check_branch
      %26 = sbr.rel (0) target = $region25
    $region24: #{tpu_custom_call.1} parent=1 // pred_region
      _
    $region25: #{tpu_custom_call.1} parent=1 // pred_fallthru
      _
    // Predicated region
    $region26: #{tpu_custom_call.1} parent=1 // pred_check
      _
    $region27: #{tpu_custom_call.1} parent=1 // pred_check_branch
      %28 = sbr.rel (0) target = $region29
    $region28: #{tpu_custom_call.1} parent=1 // pred_region
      _
    $region29: #{tpu_custom_call.1} parent=1 // pred_fallthru
      _
    %v29 = vld [vmem:[%s1] sm:$0xff]
    %v30 = vld [vmem:[%s1 + $0x8] sm:$0xff]
    %v31 = vld [vmem:[%s1 + $0x10] sm:$0xff]
    %v32 = vld [vmem:[%s1 + $0x18] sm:$0xff]
    %v33 = vld [vmem:[%s0] sm:$0xff]
    %v34 = vld [vmem:[%s0 + $0x8] sm:$0xff]
    %v35 = vld [vmem:[%s0 + $0x10] sm:$0xff]
    %v36 = vld [vmem:[%s0 + $0x18] sm:$0xff]
    %v37 = vld [vmem:[%s0 + $0x20] sm:$0xff]
    %v38 = vld [vmem:[%s0 + $0x28] sm:$0xff]
    %v39 = vld [vmem:[%s0 + $0x30] sm:$0xff]
    %v40 = vld [vmem:[%s0 + $0x38] sm:$0xff]
    %v41 = vld [vmem:[%s0 + $0x40] sm:$0xff]
    %v42 = vld [vmem:[%s0 + $0x48] sm:$0xff]
    %v43 = vld [vmem:[%s0 + $0x50] sm:$0xff]
    %v44 = vld [vmem:[%s0 + $0x58] sm:$0xff]
    %v45 = vld [vmem:[%s0 + $0x60] sm:$0xff]
    %v46 = vld [vmem:[%s0 + $0x68] sm:$0xff]
    %v47 = vld [vmem:[%s0 + $0x70] sm:$0xff]
    %v48 = vld [vmem:[%s0 + $0x78] sm:$0xff]
    %v49 = vld [vmem:[%s2] sm:$0xff]
    %v50 = vld [vmem:[%s2 + $0x8] sm:$0xff]
    %v51 = vld [vmem:[%s2 + $0x10] sm:$0xff]
    %v52 = vld [vmem:[%s2 + $0x18] sm:$0xff]
    %54 = vset.pattern.permute.xlu0 0
    %55 = vperm.xlu0 %54, %v49
    %v56 = vpop.permute.xlu0 %55
    %59 = vset.pattern.permute.xlu0 0
    %60 = vperm.xlu0 %59, %v50
    %v61 = vpop.permute.xlu0 %60
    %64 = vset.pattern.permute.xlu0 0
    %65 = vperm.xlu0 %64, %v51
    %v66 = vpop.permute.xlu0 %65
    %69 = vset.pattern.permute.xlu0 0
    %70 = vperm.xlu0 %69, %v52
    %v71 = vpop.permute.xlu0 %70
    %vm73 = vcmask 130048
    %v75 = vsel %vm73, %v29, 0
    %v78 = vsel %vm73, %v30, 0
    %v81 = vsel %vm73, %v31, 0
    %v84 = vsel %vm73, %v32, 0
    %v87 = vsel %vm73, %v33, 0
    %v90 = vsel %vm73, %v34, 0
    %v93 = vsel %vm73, %v35, 0
    %v96 = vsel %vm73, %v36, 0
    %v99 = vsel %vm73, %v37, 0
    %v102 = vsel %vm73, %v38, 0
    %v105 = vsel %vm73, %v39, 0
    %v108 = vsel %vm73, %v40, 0
    %v111 = vsel %vm73, %v41, 0
    %v114 = vsel %vm73, %v42, 0
    %v117 = vsel %vm73, %v43, 0
    %v120 = vsel %vm73, %v44, 0
    %v123 = vsel %vm73, %v45, 0
    %v126 = vsel %vm73, %v46, 0
    %v129 = vsel %vm73, %v47, 0
    %v132 = vsel %vm73, %v48, 0
    %134 = vmatprep.subr.mxu0 0.0
    %135 = vmatpush1.xpose.msra.mxu0 %v132
    %136 = vmatprep.subr.mxu0 0.0
    %137 = vmatpush1.xpose.msra.mxu0 %v129
    %138 = vmatprep.subr.mxu0 0.0
    %139 = vmatpush1.xpose.msra.mxu0 %v126
    %140 = vmatprep.subr.mxu0 0.0
    %141 = vmatpush1.xpose.msra.mxu0 %v123
    %142 = vmatprep.subr.mxu0 0.0
    %143 = vmatpush1.xpose.msra.mxu0 %v120
    %144 = vmatprep.subr.mxu0 0.0
    %145 = vmatpush1.xpose.msra.mxu0 %v117
    %146 = vmatprep.subr.mxu0 0.0
    %147 = vmatpush1.xpose.msra.mxu0 %v114
    %148 = vmatprep.subr.mxu0 0.0
    %149 = vmatpush1.xpose.msra.mxu0 %v111
    %150 = vmatprep.subr.mxu0 0.0
    %151 = vmatpush1.xpose.msra.mxu0 %v108
    %152 = vmatprep.subr.mxu0 0.0
    %153 = vmatpush1.xpose.msra.mxu0 %v105
    %154 = vmatprep.subr.mxu0 0.0
    %155 = vmatpush1.xpose.msra.mxu0 %v102
    %156 = vmatprep.subr.mxu0 0.0
    %157 = vmatpush1.xpose.msra.mxu0 %v99
    %158 = vmatprep.subr.mxu0 0.0
    %159 = vmatpush1.xpose.msra.mxu0 %v96
    %160 = vmatprep.subr.mxu0 0.0
    %161 = vmatpush1.xpose.msra.mxu0 %v93
    %162 = vmatprep.subr.mxu0 0.0
    %163 = vmatpush1.xpose.msra.mxu0 %v90
    %164 = vmatprep.subr.mxu0 0.0
    %165 = vmatpush1.xpose.msra.mxu0 %v87
    %166 = vmatprep.subr.mxu0 0.0
    %167 = vmatpush2.xpose.msra.mxu0 0.0
    %168 = vmatprep.subr.mxu0 0.0
    %169 = vmatpush2.xpose.msra.mxu0 0.0
    %170 = vmatprep.subr.mxu0 0.0
    %171 = vmatpush2.xpose.msra.mxu0 0.0
    %172 = vmatprep.subr.mxu0 0.0
    %173 = vmatpush2.xpose.msra.mxu0 0.0
    %174 = vmatprep.subr.mxu0 0.0
    %175 = vmatpush2.xpose.msra.mxu0 0.0
    %176 = vmatprep.subr.mxu0 0.0
    %177 = vmatpush2.xpose.msra.mxu0 0.0
    %178 = vmatprep.subr.mxu0 0.0
    %179 = vmatpush2.xpose.msra.mxu0 0.0
    %180 = vmatprep.subr.mxu0 0.0
    %181 = vmatpush2.xpose.msra.mxu0 0.0
    %182 = vmatprep.subr.mxu0 0.0
    %183 = vmatpush2.xpose.msra.mxu0 0.0
    %184 = vmatprep.subr.mxu0 0.0
    %185 = vmatpush2.xpose.msra.mxu0 0.0
    %186 = vmatprep.subr.mxu0 0.0
    %187 = vmatpush2.xpose.msra.mxu0 0.0
    %188 = vmatprep.subr.mxu0 0.0
    %189 = vmatpush2.xpose.msra.mxu0 0.0
    %190 = vmatprep.subr.mxu0 0.0
    %191 = vmatpush2.xpose.msra.mxu0 0.0
    %192 = vmatprep.subr.mxu0 0.0
    %193 = vmatpush2.xpose.msra.mxu0 0.0
    %194 = vmatprep.subr.mxu0 0.0
    %195 = vmatpush2.xpose.msra.mxu0 0.0
    %196 = vmatprep.subr.mxu0 0.0
    %197 = vmatpush2.xpose.msra.mxu0 0.0
    %198 = vmatprep.mubr.f32.mxu0 0.0
    %199 = vmatmul.mubr.f32.gmra.mxu0 %v75
    %v200 = vpop.f32.mrf.mxu0
    %v201 = vadd.f32 %v56, %v200
    %v202 = vpop.f32.mrf.mxu0
    %203 = vmatprep.mubr.f32.mxu0 0.0
    %204 = vmatmul.mubr.f32.gmra.mxu0 %v78
    %v205 = vpop.f32.mrf.mxu0
    %v206 = vadd.f32 %v61, %v205
    %v207 = vpop.f32.mrf.mxu0
    %208 = vmatprep.mubr.f32.mxu0 0.0
    %209 = vmatmul.mubr.f32.gmra.mxu0 %v81
    %v210 = vpop.f32.mrf.mxu0
    %v211 = vadd.f32 %v66, %v210
    %v212 = vpop.f32.mrf.mxu0
    %213 = vmatprep.mubr.f32.mxu0 0.0
    %214 = vmatmul.mubr.f32.gmra.mxu0 %v84
    %v215 = vpop.f32.mrf.mxu0
    %v216 = vadd.f32 %v71, %v215
    %v217 = vpop.f32.mrf.mxu0
    %218 = vdwg.mxu0
    %v219 = vmax.f32 %v201, 0.0
    %v220 = vmax.f32 %v206, 0.0
    %v221 = vmax.f32 %v211, 0.0
    %v222 = vmax.f32 %v216, 0.0
    %v223 = vld [vmem:[%s3] sm:$0xff]
    %v224 = vld [vmem:[%s3 + $0x8] sm:$0xff]
    %v225 = vld [vmem:[%s3 + $0x10] sm:$0xff]
    %v226 = vld [vmem:[%s3 + $0x18] sm:$0xff]
    %v227 = vld [vmem:[%s4] sm:$0xff]
    %v228 = vld [vmem:[%s4 + $0x8] sm:$0xff]
    %v229 = vld [vmem:[%s4 + $0x10] sm:$0xff]
    %v230 = vld [vmem:[%s4 + $0x18] sm:$0xff]
    %232 = vset.pattern.permute.xlu0 0
    %233 = vperm.xlu0 %232, %v227
    %v234 = vpop.permute.xlu0 %233
    %237 = vset.pattern.permute.xlu0 0
    %238 = vperm.xlu0 %237, %v228
    %v239 = vpop.permute.xlu0 %238
    %242 = vset.pattern.permute.xlu0 0
    %243 = vperm.xlu0 %242, %v229
    %v244 = vpop.permute.xlu0 %243
    %247 = vset.pattern.permute.xlu0 0
    %248 = vperm.xlu0 %247, %v230
    %v249 = vpop.permute.xlu0 %248
    %vm251 = vcmask 261120
    %v253 = vsel %vm251, %v223, 0
    %v256 = vsel %vm251, %v224, 0
    %v259 = vsel %vm251, %v225, 0
    %v262 = vsel %vm251, %v226, 0
    %264 = vmatprep.subr.mxu0 0.0
    %265 = vmatpush1.msra.mxu0 0.0
    %266 = vmatprep.subr.mxu0 0.0
    %267 = vmatpush1.msra.mxu0 0.0
    %268 = vmatprep.subr.mxu0 0.0
    %269 = vmatpush1.msra.mxu0 0.0
    %270 = vmatprep.subr.mxu0 0.0
    %271 = vmatpush1.msra.mxu0 0.0
    %272 = vmatprep.subr.mxu0 0.0
    %273 = vmatpush1.msra.mxu0 0.0
    %274 = vmatprep.subr.mxu0 0.0
    %275 = vmatpush1.msra.mxu0 0.0
    %276 = vmatprep.subr.mxu0 0.0
    %277 = vmatpush1.msra.mxu0 0.0
    %278 = vmatprep.subr.mxu0 0.0
    %279 = vmatpush1.msra.mxu0 0.0
    %280 = vmatprep.subr.mxu0 0.0
    %281 = vmatpush1.msra.mxu0 0.0
    %282 = vmatprep.subr.mxu0 0.0
    %283 = vmatpush1.msra.mxu0 0.0
    %284 = vmatprep.subr.mxu0 0.0
    %285 = vmatpush1.msra.mxu0 0.0
    %286 = vmatprep.subr.mxu0 0.0
    %287 = vmatpush1.msra.mxu0 0.0
    %288 = vmatprep.subr.mxu0 0.0
    %289 = vmatpush1.msra.mxu0 %v222
    %290 = vmatprep.subr.mxu0 0.0
    %291 = vmatpush1.msra.mxu0 %v221
    %292 = vmatprep.subr.mxu0 0.0
    %293 = vmatpush1.msra.mxu0 %v220
    %294 = vmatprep.subr.mxu0 0.0
    %295 = vmatpush1.msra.mxu0 %v219
    %296 = vmatprep.subr.mxu0 0.0
    %297 = vmatpush2.msra.mxu0 0.0
    %298 = vmatprep.subr.mxu0 0.0
    %299 = vmatpush2.msra.mxu0 0.0
    %300 = vmatprep.subr.mxu0 0.0
    %301 = vmatpush2.msra.mxu0 0.0
    %302 = vmatprep.subr.mxu0 0.0
    %303 = vmatpush2.msra.mxu0 0.0
    %304 = vmatprep.subr.mxu0 0.0
    %305 = vmatpush2.msra.mxu0 0.0
    %306 = vmatprep.subr.mxu0 0.0
    %307 = vmatpush2.msra.mxu0 0.0
    %308 = vmatprep.subr.mxu0 0.0
    %309 = vmatpush2.msra.mxu0 0.0
    %310 = vmatprep.subr.mxu0 0.0
    %311 = vmatpush2.msra.mxu0 0.0
    %312 = vmatprep.subr.mxu0 0.0
    %313 = vmatpush2.msra.mxu0 0.0
    %314 = vmatprep.subr.mxu0 0.0
    %315 = vmatpush2.msra.mxu0 0.0
    %316 = vmatprep.subr.mxu0 0.0
    %317 = vmatpush2.msra.mxu0 0.0
    %318 = vmatprep.subr.mxu0 0.0
    %319 = vmatpush2.msra.mxu0 0.0
    %320 = vmatprep.subr.mxu0 0.0
    %321 = vmatpush2.msra.mxu0 0.0
    %322 = vmatprep.subr.mxu0 0.0
    %323 = vmatpush2.msra.mxu0 0.0
    %324 = vmatprep.subr.mxu0 0.0
    %325 = vmatpush2.msra.mxu0 0.0
    %326 = vmatprep.subr.mxu0 0.0
    %327 = vmatpush2.msra.mxu0 0.0
    %328 = vmatprep.mubr.f32.mxu0 0.0
    %329 = vmatmul.mubr.f32.gmra.mxu0 %v253
    %v330 = vpop.f32.mrf.mxu0
    %v331 = vadd.f32 %v234, %v330
    %v332 = vpop.f32.mrf.mxu0
    %333 = vmatprep.mubr.f32.mxu0 0.0
    %334 = vmatmul.mubr.f32.gmra.mxu0 %v256
    %v335 = vpop.f32.mrf.mxu0
    %v336 = vadd.f32 %v239, %v335
    %v337 = vpop.f32.mrf.mxu0
    %338 = vmatprep.mubr.f32.mxu0 0.0
    %339 = vmatmul.mubr.f32.gmra.mxu0 %v259
    %v340 = vpop.f32.mrf.mxu0
    %v341 = vadd.f32 %v244, %v340
    %v342 = vpop.f32.mrf.mxu0
    %343 = vmatprep.mubr.f32.mxu0 0.0
    %344 = vmatmul.mubr.f32.gmra.mxu0 %v262
    %v345 = vpop.f32.mrf.mxu0
    %v346 = vadd.f32 %v249, %v345
    %v347 = vpop.f32.mrf.mxu0
    %348 = vdwg.mxu0
    %v349 = vmax.f32 %v331, 0.0
    %v350 = vmax.f32 %v336, 0.0
    %v351 = vmax.f32 %v341, 0.0
    %v352 = vmax.f32 %v346, 0.0
    %v353 = vld [vmem:[%s5] sm:$0x1]
    %v354 = vld [vmem:[#allocation2] sm:$0x1]
    %356 = vset.pattern.permute.xlu0 0
    %357 = vperm.xlu0 %356, %v354
    %v358 = vpop.permute.xlu0 %357
    %v360 = vlaneseq
    %v361 = vshrl.u32 %v360, 7
    %v362 = vsub.s32 0, %v361
    %v363 = vrot.slane %v358, %v362
    %v365 = vsel %vm251, %v353, 0
    %367 = vmatprep.subr.mxu0 0.0
    %368 = vmatpush1.msra.mxu0 0.0
    %369 = vmatprep.subr.mxu0 0.0
    %370 = vmatpush1.msra.mxu0 0.0
    %371 = vmatprep.subr.mxu0 0.0
    %372 = vmatpush1.msra.mxu0 0.0
    %373 = vmatprep.subr.mxu0 0.0
    %374 = vmatpush1.msra.mxu0 0.0
    %375 = vmatprep.subr.mxu0 0.0
    %376 = vmatpush1.msra.mxu0 0.0
    %377 = vmatprep.subr.mxu0 0.0
    %378 = vmatpush1.msra.mxu0 0.0
    %379 = vmatprep.subr.mxu0 0.0
    %380 = vmatpush1.msra.mxu0 0.0
    %381 = vmatprep.subr.mxu0 0.0
    %382 = vmatpush1.msra.mxu0 0.0
    %383 = vmatprep.subr.mxu0 0.0
    %384 = vmatpush1.msra.mxu0 0.0
    %385 = vmatprep.subr.mxu0 0.0
    %386 = vmatpush1.msra.mxu0 0.0
    %387 = vmatprep.subr.mxu0 0.0
    %388 = vmatpush1.msra.mxu0 0.0
    %389 = vmatprep.subr.mxu0 0.0
    %390 = vmatpush1.msra.mxu0 0.0
    %391 = vmatprep.subr.mxu0 0.0
    %392 = vmatpush1.msra.mxu0 %v352
    %393 = vmatprep.subr.mxu0 0.0
    %394 = vmatpush1.msra.mxu0 %v351
    %395 = vmatprep.subr.mxu0 0.0
    %396 = vmatpush1.msra.mxu0 %v350
    %397 = vmatprep.subr.mxu0 0.0
    %398 = vmatpush1.msra.mxu0 %v349
    %399 = vmatprep.subr.mxu0 0.0
    %400 = vmatpush2.msra.mxu0 0.0
    %401 = vmatprep.subr.mxu0 0.0
    %402 = vmatpush2.msra.mxu0 0.0
    %403 = vmatprep.subr.mxu0 0.0
    %404 = vmatpush2.msra.mxu0 0.0
    %405 = vmatprep.subr.mxu0 0.0
    %406 = vmatpush2.msra.mxu0 0.0
    %407 = vmatprep.subr.mxu0 0.0
    %408 = vmatpush2.msra.mxu0 0.0
    %409 = vmatprep.subr.mxu0 0.0
    %410 = vmatpush2.msra.mxu0 0.0
    %411 = vmatprep.subr.mxu0 0.0
    %412 = vmatpush2.msra.mxu0 0.0
    %413 = vmatprep.subr.mxu0 0.0
    %414 = vmatpush2.msra.mxu0 0.0
    %415 = vmatprep.subr.mxu0 0.0
    %416 = vmatpush2.msra.mxu0 0.0
    %417 = vmatprep.subr.mxu0 0.0
    %418 = vmatpush2.msra.mxu0 0.0
    %419 = vmatprep.subr.mxu0 0.0
    %420 = vmatpush2.msra.mxu0 0.0
    %421 = vmatprep.subr.mxu0 0.0
    %422 = vmatpush2.msra.mxu0 0.0
    %423 = vmatprep.subr.mxu0 0.0
    %424 = vmatpush2.msra.mxu0 0.0
    %425 = vmatprep.subr.mxu0 0.0
    %426 = vmatpush2.msra.mxu0 0.0
    %427 = vmatprep.subr.mxu0 0.0
    %428 = vmatpush2.msra.mxu0 0.0
    %429 = vmatprep.subr.mxu0 0.0
    %430 = vmatpush2.msra.mxu0 0.0
    %431 = vmatprep.mubr.f32.mxu0 0.0
    %432 = vmatmul.mubr.f32.gmra.mxu0 %v365
    %v433 = vpop.f32.mrf.mxu0
    %v434 = vadd.f32 %v363, %v433
    %v435 = vpop.f32.mrf.mxu0
    %436 = vdwg.mxu0
    %v437 = vmax.f32 %v434, 0.0
    %438 = vst [vmem:[#allocation3] sm:$0x1] %v437
    // Predicated region
    $region30: #{tpu_custom_call.1} parent=1 // pred_check
      _
    $region31: #{tpu_custom_call.1} parent=1 // pred_check_branch
      %440 = sbr.rel (0) target = $region33
    $region32: #{tpu_custom_call.1} parent=1 // pred_region
      %s442 = ssub.s32 16, 16
      %443 = vsyncadd [#allocation4], %s442
      %s445 = sshll.u32 [#allocation3], 4
      %s446 = int_to_ptr.vmem [resolvable:$true] %s445
      %448 = dma.vmem_to_hbm [thread:$0]  %s446, 16, %s7, [#allocation4]
    $region33: #{tpu_custom_call.1} parent=1 // pred_fallthru
      _
    // Predicated region
    $region34: #{tpu_custom_call.1} parent=1 // pred_check
      _
    $region35: #{tpu_custom_call.1} parent=1 // pred_check_branch
      %450 = sbr.rel (0) target = $region37
    $region36: #{tpu_custom_call.1} parent=1 // pred_region
      %451 = dma.done [#allocation4], 16
    $region37: #{tpu_custom_call.1} parent=1 // pred_fallthru
      _
    %452 = vsyncpa [#allocation4], 1

</llo_original>
